<compile_context>
chip_gen: v5e
topology: v5e:2x2
jax: 0.10.0
libtpu: 0.0.40
codegen_flags: <defaults>
</compile_context>

<pallas_src>
import functools

import jax
import jax.numpy as jnp
from jax import lax
from jax.experimental import pallas as pl
from jax.experimental.pallas import tpu as pltpu


# ------------------------------ Pallas kernel -------------------------------

def _llama_attn_head_kernel(x_ref, wqkv_ref, wo_ref,
                            cq_ref, sq_ref, ck_ref, sk_ref,
                            o_ref, acc_ref, *, head_dim):
    """One (batch, head) pair per grid step.

    x_ref    : (S, H)    hidden states (leading batch dim squeezed)
    wqkv_ref : (H, 3D)   bf16 concat(Wq_h, Wk_h, Wv_h) for this head
    wo_ref   : (D, H)    bf16 rows of Wo for this head
    cq_ref   : (S, D)    cos * scale          (q-side, softmax scale folded in)
    sq_ref   : (S, D)    sin * sign * scale   (q-side, rotate_half sign folded in)
    ck_ref   : (S, D)    cos                  (k-side)
    sk_ref   : (S, D)    sin * sign           (k-side)
    o_ref    : (S, H)    attention output (written on the last head)
    acc_ref  : (S, H)    f32 VMEM output-projection accumulator
    """
    D = head_dim
    half = D // 2
    h = pl.program_id(1)

    @pl.when(h == 0)
    def _():
        acc_ref[...] = jnp.zeros_like(acc_ref)

    x = x_ref[...]                                            # (S, H)
    S = x.shape[0]

    # Per-head fused QKV projection: bf16 MXU operands, f32 accumulation.
    qkv = jnp.dot(x.astype(jnp.bfloat16), wqkv_ref[...],
                  preferred_element_type=jnp.float32)         # (S, 3D) f32

    q = qkv[:, :D]
    k = qkv[:, D:2 * D]
    v = qkv[:, 2 * D:]

    # RoPE in f32.  rotate_half == lane half-swap (pltpu.roll, XLU slot);
    # the (-1,+1) sign lives in sq/sk and the softmax scale in cq/sq.
    q = q * cq_ref[...] + pltpu.roll(q, shift=half, axis=1) * sq_ref[...]
    k = k * ck_ref[...] + pltpu.roll(k, shift=half, axis=1) * sk_ref[...]

    # Scores: contract last dims directly (no explicit k transpose), bf16 in,
    # f32 accumulate.
    s = lax.dot_general(q.astype(jnp.bfloat16), k.astype(jnp.bfloat16),
                        (((1,), (1,)), ((), ())),
                        preferred_element_type=jnp.float32)   # (S, S) f32

    row = lax.broadcasted_iota(jnp.int32, (S, S), 0)
    col = lax.broadcasted_iota(jnp.int32, (S, S), 1)
    s = jnp.where(col > row, jnp.float32(-1e30), s)           # causal mask

    # Numerically stable softmax in f32; divide via approx reciprocal (EUP).
    m = jnp.max(s, axis=-1, keepdims=True)
    p = jnp.exp(s - m)
    denom = jnp.sum(p, axis=-1, keepdims=True)
    p = p * pl.reciprocal(denom, approx=True)

    pv = jnp.dot(p.astype(jnp.bfloat16), v.astype(jnp.bfloat16),
                 preferred_element_type=jnp.float32)          # (S, D) f32

    # Output projection accumulated per head (no head concat, no (S,H) attn
    # intermediate); maps to in-place MXU accumulation on v7x.
    acc_ref[...] += jnp.dot(pv.astype(jnp.bfloat16), wo_ref[...],
                            preferred_element_type=jnp.float32)

    @pl.when(h == pl.num_programs(1) - 1)
    def _():
        o_ref[...] = acc_ref[...].astype(o_ref.dtype)


def _attention_pallas(x, wqkv_h, wo_h, cq, sq, ck, sk, num_heads, head_dim):
    B, S, H = x.shape
    D = head_dim
    kern = functools.partial(_llama_attn_head_kernel, head_dim=D)
    return pl.pallas_call(
        kern,
        out_shape=jax.ShapeDtypeStruct((B, S, H), x.dtype),
        grid=(B, num_heads),
        in_specs=[
            pl.BlockSpec((pl.Squeezed(), S, H), lambda b, h: (b, 0, 0)),
            pl.BlockSpec((pl.Squeezed(), H, 3 * D), lambda b, h: (h, 0, 0)),
            pl.BlockSpec((pl.Squeezed(), D, H), lambda b, h: (h, 0, 0)),
            pl.BlockSpec((S, D), lambda b, h: (0, 0)),
            pl.BlockSpec((S, D), lambda b, h: (0, 0)),
            pl.BlockSpec((S, D), lambda b, h: (0, 0)),
            pl.BlockSpec((S, D), lambda b, h: (0, 0)),
        ],
        out_specs=pl.BlockSpec((pl.Squeezed(), S, H), lambda b, h: (b, 0, 0)),
        scratch_shapes=[pltpu.VMEM((S, H), jnp.float32)],
        compiler_params=pltpu.CompilerParams(
            dimension_semantics=("parallel", "arbitrary"),
            vmem_limit_bytes=32 * 1024 * 1024),
    )(x, wqkv_h, wo_h, cq, sq, ck, sk)


# ------------------------------ wrapper / glue -------------------------------

def rotary_tables(seq_len, head_dim):
    inv_freq = 1.0 / (10000.0 ** (jnp.arange(0, head_dim, 2, dtype=jnp.float32)
                                  / head_dim))
    t = jnp.arange(seq_len, dtype=jnp.float32)
    freqs = jnp.einsum("i,j->ij", t, inv_freq)            # (S, D/2)
    emb = jnp.concatenate([freqs, freqs], axis=-1)        # (S, D)
    return jnp.cos(emb), jnp.sin(emb)


def llama_attention_forward(x, wq, wk, wv, wo, *, num_heads):
    """x: (B, S, H); wq/wk/wv/wo: (H, H) in (in, out) layout (y = x @ W)."""
    B, S, H = x.shape
    D = H // num_heads
    half = D // 2
    scale = D ** -0.5

    cos, sin = rotary_tables(S, D)
    sign = jnp.concatenate([-jnp.ones((half,), jnp.float32),
                            jnp.ones((half,), jnp.float32)])
    sin_signed = sin * sign                                # rotate_half sign folded in

    # Per-head fused QKV weight (nH, H, 3D) and per-head Wo rows (nH, D, H),
    # bf16 so the MXU gets native operands and VMEM/DMA bytes are halved.
    def cols(w):                                           # (H,H) -> (nH, H, D)
        return w.reshape(H, num_heads, D).transpose(1, 0, 2)
    wqkv_h = jnp.concatenate([cols(wq), cols(wk), cols(wv)],
                             axis=-1).astype(jnp.bfloat16)  # (nH, H, 3D)
    wo_h = wo.reshape(num_heads, D, H).astype(jnp.bfloat16)  # (nH, D, H)

    return _attention_pallas(x, wqkv_h, wo_h,
                             cos * scale, sin_signed * scale,  # q-side (scale folded)
                             cos, sin_signed,                  # k-side
                             num_heads, D)


# ----------------------------- pure-JAX reference ----------------------------

def reference_attention(x, wq, wk, wv, wo, num_heads):
    B, S, H = x.shape
    D = H // num_heads
    cos, sin = rotary_tables(S, D)

    q = x @ wq
    k = x @ wk
    v = x @ wv

    def split(t):
        return t.reshape(B, S, num_heads, D).transpose(0, 2, 1, 3)  # (B, nH, S, D)

    q, k, v = split(q), split(k), split(v)

    def rot(t):
        return jnp.concatenate([-t[..., D // 2:], t[..., :D // 2]], axis=-1)

    q = q * cos + rot(q) * sin
    k = k * cos + rot(k) * sin

    s = jnp.einsum("bhqd,bhkd->bhqk", q, k) * (D ** -0.5)
    mask = jnp.triu(jnp.ones((S, S), bool), k=1)
    s = jnp.where(mask, -jnp.inf, s)
    p = jax.nn.softmax(s, axis=-1)
    o = jnp.einsum("bhqk,bhkd->bhqd", p, v)
    o = o.transpose(0, 2, 1, 3).reshape(B, S, H)
    return o @ wo


# ----------------------------------- main ------------------------------------

if __name__ == "__main__":
    num_heads = 2
    hidden = 256        # head_dim = 128 -> lane-aligned per-head tiles
    B, S = 2, 16

    key = jax.random.PRNGKey(0)
    kx, kq, kk, kv, ko = jax.random.split(key, 5)

    x = jax.random.normal(kx, (B, S, hidden), dtype=jnp.float32)

    def lin(k):
        # nn.Linear(bias=False)-style weight, stored (in, out) so y = x @ W
        return (0.05 * jax.random.normal(k, (hidden, hidden))).astype(jnp.float32)

    wq, wk, wv, wo = lin(kq), lin(kk), lin(kv), lin(ko)

    fwd = jax.jit(functools.partial(llama_attention_forward, num_heads=num_heads))
    out = fwd(x, wq, wk, wv, wo)
    jax.block_until_ready(out)

    ref = reference_attention(x, wq, wk, wv, wo, num_heads)

    assert out.shape == (B, S, hidden)
    assert bool(jnp.all(jnp.isfinite(out)))
    max_err = float(jnp.max(jnp.abs(out - ref)))
    # bf16 MXU operands with f32 accumulation: tolerance sized for bf16 rounding.
    assert bool(jnp.allclose(out, ref, rtol=2e-2, atol=2e-2)), max_err
    print("KERNEL_OK")
</pallas_src>

<mosaic_0001>
module attributes {stable_mosaic.version = 11 : i64} {
  func.func @_llama_attn_head_kernel(%arg0: i32, %arg1: i32, %arg2: memref<1x16x256xf32, #tpu.memory_space<vmem>>, %arg3: memref<1x256x384xbf16, #tpu.memory_space<vmem>>, %arg4: memref<1x128x256xbf16, #tpu.memory_space<vmem>>, %arg5: memref<16x128xf32, #tpu.memory_space<vmem>>, %arg6: memref<16x128xf32, #tpu.memory_space<vmem>>, %arg7: memref<16x128xf32, #tpu.memory_space<vmem>>, %arg8: memref<16x128xf32, #tpu.memory_space<vmem>>, %arg9: memref<1x16x256xf32, #tpu.memory_space<vmem>>, %arg10: memref<16x256xf32, #tpu.memory_space<vmem>>) attributes {dimension_semantics = [#tpu.dimension_semantics<parallel>, #tpu.dimension_semantics<arbitrary>], iteration_bounds = array<i64: 2, 2>, scalar_prefetch = 0 : i64, scratch_operands = 1 : i64, tpu.core_type = #tpu.core_type<tc>, window_params = [{transform_indices = @transform_0, window_bounds = array<i64: 1, 16, 256>}, {transform_indices = @transform_1, window_bounds = array<i64: 1, 256, 384>}, {transform_indices = @transform_2, window_bounds = array<i64: 1, 128, 256>}, {pipeline_mode = #tpu.pipeline_mode<synchronous>, transform_indices = @transform_3, window_bounds = array<i64: 16, 128>}, {pipeline_mode = #tpu.pipeline_mode<synchronous>, transform_indices = @transform_4, window_bounds = array<i64: 16, 128>}, {pipeline_mode = #tpu.pipeline_mode<synchronous>, transform_indices = @transform_5, window_bounds = array<i64: 16, 128>}, {pipeline_mode = #tpu.pipeline_mode<synchronous>, transform_indices = @transform_6, window_bounds = array<i64: 16, 128>}, {transform_indices = @transform_7, window_bounds = array<i64: 1, 16, 256>}]} {
    %c0_i32 = arith.constant 0 : i32
    %0 = arith.cmpi eq, %arg1, %c0_i32 : i32
    %1 = arith.extui %0 : i1 to i32
    %c0_i32_0 = arith.constant 0 : i32
    %2 = arith.cmpi ne, %1, %c0_i32_0 : i32
    scf.if %2 {
      %cst_29 = arith.constant 0.000000e+00 : f32
      %55 = vector.broadcast %cst_29 : f32 to vector<16x256xf32>
      %c0_30 = arith.constant 0 : index
      %c0_31 = arith.constant 0 : index
      %56 = vector.load %arg10[%c0_30, %c0_31] : memref<16x256xf32, #tpu.memory_space<vmem>>, vector<16x256xf32>
      tpu.vector_store %arg10[%c0_30, %c0_31], %55 {strides = array<i32>} : memref<16x256xf32, #tpu.memory_space<vmem>>, vector<16x256xf32>,
    } else {
    }
    %c0 = arith.constant 0 : index
    %c0_1 = arith.constant 0 : index
    %c0_2 = arith.constant 0 : index
    %3 = vector.load %arg2[%c0, %c0_1, %c0_2] : memref<1x16x256xf32, #tpu.memory_space<vmem>>, vector<1x16x256xf32>
    %4 = vector.shape_cast %3 : vector<1x16x256xf32> to vector<16x256xf32>
    %5 = arith.truncf %4 : vector<16x256xf32> to vector<16x256xbf16>
    %c0_3 = arith.constant 0 : index
    %c0_4 = arith.constant 0 : index
    %c0_5 = arith.constant 0 : index
    %6 = vector.load %arg3[%c0_3, %c0_4, %c0_5] : memref<1x256x384xbf16, #tpu.memory_space<vmem>>, vector<1x256x384xbf16>
    %7 = vector.shape_cast %6 : vector<1x256x384xbf16> to vector<256x384xbf16>
    %cst = arith.constant dense<0.000000e+00> : vector<16x384xf32>
    %8 = tpu.matmul %5, %7, %cst {dimension_numbers = #tpu.dot_dimension_numbers<[1], [0], [0], [1], [0, 0, 1, 1], [], []>} : vector<16x256xbf16>, vector<256x384xbf16>, vector<16x384xf32> -> vector<16x384xf32>
    %9 = vector.extract_strided_slice %8 {offsets = [0, 0], sizes = [16, 128], strides = [1, 1]} : vector<16x384xf32> to vector<16x128xf32>
    %10 = vector.extract_strided_slice %8 {offsets = [0, 128], sizes = [16, 128], strides = [1, 1]} : vector<16x384xf32> to vector<16x128xf32>
    %11 = vector.extract_strided_slice %8 {offsets = [0, 256], sizes = [16, 128], strides = [1, 1]} : vector<16x384xf32> to vector<16x128xf32>
    %c0_6 = arith.constant 0 : index
    %c0_7 = arith.constant 0 : index
    %12 = vector.load %arg5[%c0_6, %c0_7] : memref<16x128xf32, #tpu.memory_space<vmem>>, vector<16x128xf32>
    %13 = arith.mulf %9, %12 : vector<16x128xf32>
    %c64_i32 = arith.constant 64 : i32
    %14 = tpu.dynamic_rotate %9 by %c64_i32 dim 1 : vector<16x128xf32>, i32 -> vector<16x128xf32>
    %c0_8 = arith.constant 0 : index
    %c0_9 = arith.constant 0 : index
    %15 = vector.load %arg6[%c0_8, %c0_9] : memref<16x128xf32, #tpu.memory_space<vmem>>, vector<16x128xf32>
    %16 = arith.mulf %14, %15 : vector<16x128xf32>
    %17 = arith.addf %13, %16 : vector<16x128xf32>
    %c0_10 = arith.constant 0 : index
    %c0_11 = arith.constant 0 : index
    %18 = vector.load %arg7[%c0_10, %c0_11] : memref<16x128xf32, #tpu.memory_space<vmem>>, vector<16x128xf32>
    %19 = arith.mulf %10, %18 : vector<16x128xf32>
    %c64_i32_12 = arith.constant 64 : i32
    %20 = tpu.dynamic_rotate %10 by %c64_i32_12 dim 1 : vector<16x128xf32>, i32 -> vector<16x128xf32>
    %c0_13 = arith.constant 0 : index
    %c0_14 = arith.constant 0 : index
    %21 = vector.load %arg8[%c0_13, %c0_14] : memref<16x128xf32, #tpu.memory_space<vmem>>, vector<16x128xf32>
    %22 = arith.mulf %20, %21 : vector<16x128xf32>
    %23 = arith.addf %19, %22 : vector<16x128xf32>
    %24 = arith.truncf %17 : vector<16x128xf32> to vector<16x128xbf16>
    %25 = arith.truncf %23 : vector<16x128xf32> to vector<16x128xbf16>
    %cst_15 = arith.constant dense<0.000000e+00> : vector<16x16xf32>
    %26 = tpu.matmul %24, %25, %cst_15 {dimension_numbers = #tpu.dot_dimension_numbers<[1], [1], [0], [0], [0, 0, 1, 0], [], []>} : vector<16x128xbf16>, vector<16x128xbf16>, vector<16x16xf32> -> vector<16x16xf32>
    %27 = tpu.iota {dimensions = array<i32: 0>} : vector<16x16xi32>
    %28 = tpu.iota {dimensions = array<i32: 1>} : vector<16x16xi32>
    %29 = arith.cmpi sgt, %28, %27 : vector<16x16xi32>
    %cst_16 = arith.constant -1.000000e+30 : f32
    %30 = vector.broadcast %cst_16 : f32 to vector<16x16xf32>
    %31 = arith.select %29, %30, %26 : vector<16x16xi1>, vector<16x16xf32>
    %cst_17 = arith.constant dense<0xFF800000> : vector<16xf32>
    %32 = vector.multi_reduction <maximumf>, %31, %cst_17 [1] : vector<16x16xf32> to vector<16xf32>
    %33 = vector.shape_cast %32 : vector<16xf32> to vector<16x1xf32>
    %34 = vector.broadcast %33 : vector<16x1xf32> to vector<16x16xf32>
    %35 = arith.subf %31, %34 : vector<16x16xf32>
    %36 = math.exp %35 : vector<16x16xf32>
    %cst_18 = arith.constant dense<0.000000e+00> : vector<16xf32>
    %37 = vector.multi_reduction <add>, %36, %cst_18 [1] : vector<16x16xf32> to vector<16xf32>
    %38 = vector.shape_cast %37 : vector<16xf32> to vector<16x1xf32>
    %39 = tpu.reciprocal %38 {approx = true} : vector<16x1xf32> -> vector<16x1xf32>
    %40 = vector.broadcast %39 : vector<16x1xf32> to vector<16x16xf32>
    %41 = arith.mulf %36, %40 : vector<16x16xf32>
    %42 = arith.truncf %41 : vector<16x16xf32> to vector<16x16xbf16>
    %43 = arith.truncf %11 : vector<16x128xf32> to vector<16x128xbf16>
    %cst_19 = arith.constant dense<0.000000e+00> : vector<16x128xf32>
    %44 = tpu.matmul %42, %43, %cst_19 {dimension_numbers = #tpu.dot_dimension_numbers<[1], [0], [0], [1], [0, 0, 1, 1], [], []>} : vector<16x16xbf16>, vector<16x128xbf16>, vector<16x128xf32> -> vector<16x128xf32>
    %c0_20 = arith.constant 0 : index
    %c0_21 = arith.constant 0 : index
    %45 = vector.load %arg10[%c0_20, %c0_21] : memref<16x256xf32, #tpu.memory_space<vmem>>, vector<16x256xf32>
    %46 = arith.truncf %44 : vector<16x128xf32> to vector<16x128xbf16>
    %c0_22 = arith.constant 0 : index
    %c0_23 = arith.constant 0 : index
    %c0_24 = arith.constant 0 : index
    %47 = vector.load %arg4[%c0_22, %c0_23, %c0_24] : memref<1x128x256xbf16, #tpu.memory_space<vmem>>, vector<1x128x256xbf16>
    %48 = vector.shape_cast %47 : vector<1x128x256xbf16> to vector<128x256xbf16>
    %cst_25 = arith.constant dense<0.000000e+00> : vector<16x256xf32>
    %49 = tpu.matmul %46, %48, %cst_25 {dimension_numbers = #tpu.dot_dimension_numbers<[1], [0], [0], [1], [0, 0, 1, 1], [], []>} : vector<16x128xbf16>, vector<128x256xbf16>, vector<16x256xf32> -> vector<16x256xf32>
    %50 = arith.addf %45, %49 : vector<16x256xf32>
    %c0_26 = arith.constant 0 : index
    %c0_27 = arith.constant 0 : index
    %51 = vector.load %arg10[%c0_26, %c0_27] : memref<16x256xf32, #tpu.memory_space<vmem>>, vector<16x256xf32>
    tpu.vector_store %arg10[%c0_26, %c0_27], %50 {strides = array<i32>} : memref<16x256xf32, #tpu.memory_space<vmem>>, vector<16x256xf32>,
    %c1_i32 = arith.constant 1 : i32
    %52 = arith.cmpi eq, %arg1, %c1_i32 : i32
    %53 = arith.extui %52 : i1 to i32
    %c0_i32_28 = arith.constant 0 : i32
    %54 = arith.cmpi ne, %53, %c0_i32_28 : i32
    scf.if %54 {
      %c0_29 = arith.constant 0 : index
      %c0_30 = arith.constant 0 : index
      %55 = vector.load %arg10[%c0_29, %c0_30] : memref<16x256xf32, #tpu.memory_space<vmem>>, vector<16x256xf32>
      %c0_31 = arith.constant 0 : index
      %c0_32 = arith.constant 0 : index
      %c0_33 = arith.constant 0 : index
      %56 = vector.load %arg9[%c0_31, %c0_32, %c0_33] : memref<1x16x256xf32, #tpu.memory_space<vmem>>, vector<1x16x256xf32>
      %57 = vector.shape_cast %56 : vector<1x16x256xf32> to vector<16x256xf32>
      %58 = vector.shape_cast %55 : vector<16x256xf32> to vector<1x16x256xf32>
      tpu.vector_store %arg9[%c0_31, %c0_32, %c0_33], %58 {strides = array<i32>} : memref<1x16x256xf32, #tpu.memory_space<vmem>>, vector<1x16x256xf32>,
    } else {
    }
    return
  }
  func.func @transform_0(%arg0: i32, %arg1: i32) -> (i32, i32, i32) {
    %c0_i32 = arith.constant 0 : i32
    %c0_i32_0 = arith.constant 0 : i32
    %c0_i32_1 = arith.constant 0 : i32
    return %arg0, %c0_i32, %c0_i32_0 : i32, i32, i32
  }
  func.func @transform_1(%arg0: i32, %arg1: i32) -> (i32, i32, i32) {
    %c0_i32 = arith.constant 0 : i32
    %c0_i32_0 = arith.constant 0 : i32
    %c0_i32_1 = arith.constant 0 : i32
    return %arg1, %c0_i32, %c0_i32_0 : i32, i32, i32
  }
  func.func @transform_2(%arg0: i32, %arg1: i32) -> (i32, i32, i32) {
    %c0_i32 = arith.constant 0 : i32
    %c0_i32_0 = arith.constant 0 : i32
    %c0_i32_1 = arith.constant 0 : i32
    return %arg1, %c0_i32, %c0_i32_0 : i32, i32, i32
  }
  func.func @transform_3(%arg0: i32, %arg1: i32) -> (i32, i32) {
    %c0_i32 = arith.constant 0 : i32
    %c0_i32_0 = arith.constant 0 : i32
    %c0_i32_1 = arith.constant 0 : i32
    return %c0_i32, %c0_i32_0 : i32, i32
  }
  func.func @transform_4(%arg0: i32, %arg1: i32) -> (i32, i32) {
    %c0_i32 = arith.constant 0 : i32
    %c0_i32_0 = arith.constant 0 : i32
    %c0_i32_1 = arith.constant 0 : i32
    return %c0_i32, %c0_i32_0 : i32, i32
  }
  func.func @transform_5(%arg0: i32, %arg1: i32) -> (i32, i32) {
    %c0_i32 = arith.constant 0 : i32
    %c0_i32_0 = arith.constant 0 : i32
    %c0_i32_1 = arith.constant 0 : i32
    return %c0_i32, %c0_i32_0 : i32, i32
  }
  func.func @transform_6(%arg0: i32, %arg1: i32) -> (i32, i32) {
    %c0_i32 = arith.constant 0 : i32
    %c0_i32_0 = arith.constant 0 : i32
    %c0_i32_1 = arith.constant 0 : i32
    return %c0_i32, %c0_i32_0 : i32, i32
  }
  func.func @transform_7(%arg0: i32, %arg1: i32) -> (i32, i32, i32) {
    %c0_i32 = arith.constant 0 : i32
    %c0_i32_0 = arith.constant 0 : i32
    %c0_i32_1 = arith.constant 0 : i32
    return %arg0, %c0_i32, %c0_i32_0 : i32, i32, i32
  }
}

</mosaic_0001>

<llo_original>
// kernel: llama_attention_forward.1
$region0: #{llama_attention_forward.1}
  #allocation0 [shape = 'u32[]', space=smem, size = 0x4, offset = 0x4, fixed_abs, tag = 'smem constant byte address 0x4 - core index']
  #allocation1 [shape = 'u32[72,128]{1,0:T(1,128)}', space=vmem, size = 0x9000, scoped, tag = 'internal scratch']
  #allocation2 [shape = 'f32[16,256]{1,0:T(8,128)}', space=vmem, size = 0x4000, scoped, tag = 'scratch operand']
  %s0 = inlined_call_operand.vmem [shape: f32[2,16,256], index: 0, kind: input, shape index: {}]
  %s1 = inlined_call_operand.vmem [shape: bf16[2,256,384], index: 1, kind: input, shape index: {}]
  %s2 = inlined_call_operand.vmem [shape: bf16[2,128,256], index: 2, kind: input, shape index: {}]
  %s3 = inlined_call_operand.vmem [shape: f32[16,128], index: 3, kind: input, shape index: {}]
  %s4 = inlined_call_operand.vmem [shape: f32[16,128], index: 4, kind: input, shape index: {}]
  %s5 = inlined_call_operand.vmem [shape: f32[16,128], index: 5, kind: input, shape index: {}]
  %s6 = inlined_call_operand.vmem [shape: f32[16,128], index: 6, kind: input, shape index: {}]
  %s7 = inlined_call_operand.hbm [shape: f32[2,16,256], index: 7, kind: output, shape index: {}]
  %s8 = sld [smem:[#allocation0]]
  $region69: #{llama_attention_forward.1} parent=0
    _
  %s10 = ssub.s32 1, %s8
  %s11 = scalar_select 0, %s10, %s8
  $region1: #{llama_attention_forward.1} parent=0
    #allocation3 [shape = 'u8[32768]{0}', space=vmem, size = 0x8000, scoped, tag = 'output window, operand 0']
    #allocation4 [shape = 's32[2]{0}', space=sflag, size = 0x8, scoped, tag = 'scoped memory for llama_attention_forward.1']
    %12 = vsyncpa [#allocation4], 0
    %s13 = scalar_lea.sflag [#allocation4], 1
    %14 = vsyncpa %s13, 0
    loop: start=0, step=1, limit=6
    $region2: #{llama_attention_forward.1} parent=1 // loop_pre_header
      _
    $region3: #{llama_attention_forward.1} parent=1 // loop_header
      %s16 = sphi 0, %s20
      %p17 = scmp.ge.s32.totalorder %s16, 6
      %s23 = sphi 0, %s35
      %s24 = sphi 0, %s31
      %s25 = sphi 0, %s23
      %s26 = sphi 0, %s24
      %s27 = sphi 0, %s25
      %s28 = sphi 0, %s26
      %s38 = sphi 0, %s40
      %s41 = sphi 0, %s38
      %s42 = sphi 0, %s41
      %s58 = sphi 0, %s42
      %s64 = sphi 0, %s66
      %s67 = sphi 0, %s64
      %s68 = sphi 0, %s67
      %s84 = sphi 0, %s68
      %s90 = sphi 0, %s92
      %s93 = sphi 0, %s90
      %s94 = sphi 0, %s93
      %s110 = sphi 0, %s94
      %s114 = sphi 0, %s114
      %s116 = sphi 0, %s114
      %s117 = sphi 0, %s116
      %s131 = sphi 0, %s117
      %s135 = sphi 0, %s135
      %s137 = sphi 0, %s135
      %s138 = sphi 0, %s137
      %s152 = sphi 0, %s138
      %s156 = sphi 0, %s156
      %s158 = sphi 0, %s156
      %s159 = sphi 0, %s158
      %s173 = sphi 0, %s159
      %s177 = sphi 0, %s177
      %s179 = sphi 0, %s177
      %s180 = sphi 0, %s179
      %s194 = sphi 0, %s180
      %s200 = sphi 0, %s202
      %s203 = sphi 0, %s200
      %s204 = sphi 0, %s203
      %s220 = sphi 0, %s204
    $region4: #{llama_attention_forward.1} parent=1 // loop_header_branch
      %19 = sbr.rel (%p17) target = $region8
    $region5: #{llama_attention_forward.1} parent=1 // loop_body
      %s21 = ssub.s32 %s16, 1
      %s22 = ssub.s32 %s16, 2
      %s29 = sadd.s32 1, %s24
      %p30 = scmp.ge.s32.totalorder %s29, 2
      %s31 = scalar_select %p30, 0, %s29
      %s32 = sadd.s32 1, %s23
      %s33 = scalar_select %p30, %s32, %s23
      %p34 = scmp.ge.s32.totalorder %s33, 2
      %s35 = scalar_select %p34, 0, %s33
      %s36 = ssub.s32 %s23, %s35
      %p37 = scmp.eq.s32.totalorder %s36, 0
      %s39 = sadd.s32 %s38, 1
      %s40 = scalar_select %p37, %s38, %s39
      %p43 = pneg %p37
      %p44 = scmp.eq.s32.totalorder %s16, 3
      %p45 = por %p43, %p44
      %p46 = scmp.ne.s32.totalorder %s38, %s41
      %p47 = scmp.eq.s32.totalorder %s16, 0
      %p48 = por %p46, %p47
      %p49 = scmp.ne.s32.totalorder %s38, %s41
      %p50 = scmp.eq.s32.totalorder %s21, 3
      %p51 = por %p49, %p50
      %p52 = scmp.ne.s32.totalorder %s41, %s42
      %p53 = scmp.eq.s32.totalorder %s21, 0
      %p54 = por %p52, %p53
      %p55 = scmp.ne.s32.totalorder %s41, %s42
      %p56 = scmp.eq.s32.totalorder %s22, 3
      %p57 = por %p55, %p56
      %p59 = scmp.ne.s32.totalorder %s42, %s58
      %p60 = scmp.eq.s32.totalorder %s22, 0
      %p61 = por %p59, %p60
      %s62 = ssub.s32 %s24, %s31
      %p63 = scmp.eq.s32.totalorder %s62, 0
      %s65 = sadd.s32 %s64, 1
      %s66 = scalar_select %p63, %s64, %s65
      %p69 = pneg %p63
      %p70 = scmp.eq.s32.totalorder %s16, 3
      %p71 = por %p69, %p70
      %p72 = scmp.ne.s32.totalorder %s64, %s67
      %p73 = scmp.eq.s32.totalorder %s16, 0
      %p74 = por %p72, %p73
      %p75 = scmp.ne.s32.totalorder %s64, %s67
      %p76 = scmp.eq.s32.totalorder %s21, 3
      %p77 = por %p75, %p76
      %p78 = scmp.ne.s32.totalorder %s67, %s68
      %p79 = scmp.eq.s32.totalorder %s21, 0
      %p80 = por %p78, %p79
      %p81 = scmp.ne.s32.totalorder %s67, %s68
      %p82 = scmp.eq.s32.totalorder %s22, 3
      %p83 = por %p81, %p82
      %p85 = scmp.ne.s32.totalorder %s68, %s84
      %p86 = scmp.eq.s32.totalorder %s22, 0
      %p87 = por %p85, %p86
      %s88 = ssub.s32 %s24, %s31
      %p89 = scmp.eq.s32.totalorder %s88, 0
      %s91 = sadd.s32 %s90, 1
      %s92 = scalar_select %p89, %s90, %s91
      %p95 = pneg %p89
      %p96 = scmp.eq.s32.totalorder %s16, 3
      %p97 = por %p95, %p96
      %p98 = scmp.ne.s32.totalorder %s90, %s93
      %p99 = scmp.eq.s32.totalorder %s16, 0
      %p100 = por %p98, %p99
      %p101 = scmp.ne.s32.totalorder %s90, %s93
      %p102 = scmp.eq.s32.totalorder %s21, 3
      %p103 = por %p101, %p102
      %p104 = scmp.ne.s32.totalorder %s93, %s94
      %p105 = scmp.eq.s32.totalorder %s21, 0
      %p106 = por %p104, %p105
      %p107 = scmp.ne.s32.totalorder %s93, %s94
      %p108 = scmp.eq.s32.totalorder %s22, 3
      %p109 = por %p107, %p108
      %p111 = scmp.ne.s32.totalorder %s94, %s110
      %p112 = scmp.eq.s32.totalorder %s22, 0
      %p113 = por %p111, %p112
      %s115 = sadd.s32 %s114, 1
      %p118 = scmp.eq.s32.totalorder %s16, 3
      %p119 = scmp.ne.s32.totalorder %s114, %s116
      %p120 = scmp.eq.s32.totalorder %s16, 0
      %p121 = por %p119, %p120
      %p122 = scmp.ne.s32.totalorder %s114, %s116
      %p123 = scmp.eq.s32.totalorder %s21, 3
      %p124 = por %p122, %p123
      %p125 = scmp.ne.s32.totalorder %s116, %s117
      %p126 = scmp.eq.s32.totalorder %s21, 0
      %p127 = por %p125, %p126
      %p128 = scmp.ne.s32.totalorder %s116, %s117
      %p129 = scmp.eq.s32.totalorder %s22, 3
      %p130 = por %p128, %p129
      %p132 = scmp.ne.s32.totalorder %s117, %s131
      %p133 = scmp.eq.s32.totalorder %s22, 0
      %p134 = por %p132, %p133
      %s136 = sadd.s32 %s135, 1
      %p139 = scmp.eq.s32.totalorder %s16, 3
      %p140 = scmp.ne.s32.totalorder %s135, %s137
      %p141 = scmp.eq.s32.totalorder %s16, 0
      %p142 = por %p140, %p141
      %p143 = scmp.ne.s32.totalorder %s135, %s137
      %p144 = scmp.eq.s32.totalorder %s21, 3
      %p145 = por %p143, %p144
      %p146 = scmp.ne.s32.totalorder %s137, %s138
      %p147 = scmp.eq.s32.totalorder %s21, 0
      %p148 = por %p146, %p147
      %p149 = scmp.ne.s32.totalorder %s137, %s138
      %p150 = scmp.eq.s32.totalorder %s22, 3
      %p151 = por %p149, %p150
      %p153 = scmp.ne.s32.totalorder %s138, %s152
      %p154 = scmp.eq.s32.totalorder %s22, 0
      %p155 = por %p153, %p154
      %s157 = sadd.s32 %s156, 1
      %p160 = scmp.eq.s32.totalorder %s16, 3
      %p161 = scmp.ne.s32.totalorder %s156, %s158
      %p162 = scmp.eq.s32.totalorder %s16, 0
      %p163 = por %p161, %p162
      %p164 = scmp.ne.s32.totalorder %s156, %s158
      %p165 = scmp.eq.s32.totalorder %s21, 3
      %p166 = por %p164, %p165
      %p167 = scmp.ne.s32.totalorder %s158, %s159
      %p168 = scmp.eq.s32.totalorder %s21, 0
      %p169 = por %p167, %p168
      %p170 = scmp.ne.s32.totalorder %s158, %s159
      %p171 = scmp.eq.s32.totalorder %s22, 3
      %p172 = por %p170, %p171
      %p174 = scmp.ne.s32.totalorder %s159, %s173
      %p175 = scmp.eq.s32.totalorder %s22, 0
      %p176 = por %p174, %p175
      %s178 = sadd.s32 %s177, 1
      %p181 = scmp.eq.s32.totalorder %s16, 3
      %p182 = scmp.ne.s32.totalorder %s177, %s179
      %p183 = scmp.eq.s32.totalorder %s16, 0
      %p184 = por %p182, %p183
      %p185 = scmp.ne.s32.totalorder %s177, %s179
      %p186 = scmp.eq.s32.totalorder %s21, 3
      %p187 = por %p185, %p186
      %p188 = scmp.ne.s32.totalorder %s179, %s180
      %p189 = scmp.eq.s32.totalorder %s21, 0
      %p190 = por %p188, %p189
      %p191 = scmp.ne.s32.totalorder %s179, %s180
      %p192 = scmp.eq.s32.totalorder %s22, 3
      %p193 = por %p191, %p192
      %p195 = scmp.ne.s32.totalorder %s180, %s194
      %p196 = scmp.eq.s32.totalorder %s22, 0
      %p197 = por %p195, %p196
      %s198 = ssub.s32 %s23, %s35
      %p199 = scmp.eq.s32.totalorder %s198, 0
      %s201 = sadd.s32 %s200, 1
      %s202 = scalar_select %p199, %s200, %s201
      %p205 = pneg %p199
      %p206 = scmp.eq.s32.totalorder %s16, 3
      %p207 = por %p205, %p206
      %p208 = scmp.ne.s32.totalorder %s200, %s203
      %p209 = scmp.eq.s32.totalorder %s16, 0
      %p210 = por %p208, %p209
      %p211 = scmp.ne.s32.totalorder %s200, %s203
      %p212 = scmp.eq.s32.totalorder %s21, 3
      %p213 = por %p211, %p212
      %p214 = scmp.ne.s32.totalorder %s203, %s204
      %p215 = scmp.eq.s32.totalorder %s21, 0
      %p216 = por %p214, %p215
      %p217 = scmp.ne.s32.totalorder %s203, %s204
      %p218 = scmp.eq.s32.totalorder %s22, 3
      %p219 = por %p217, %p218
      %p221 = scmp.ne.s32.totalorder %s204, %s220
      %p222 = scmp.eq.s32.totalorder %s22, 0
      %p223 = por %p221, %p222
      %p224 = scmp.le.s32.totalorder 1, %s16
      %p225 = scmp.lt.s32.totalorder %s16, 5
      %p226 = pnand %p224, %p225
      %p227 = pneg %p226
      // Predicated region
      $region9: #{llama_attention_forward.1} parent=5 // pred_check
        _
      $region10: #{llama_attention_forward.1} parent=5 // pred_check_branch
        %229 = sbr.rel (%p226) target = $region12
      $region11: #{llama_attention_forward.1} parent=5 // pred_region
        %s230 = ssub.s32 %s16, 1
        // Predicated region
        $region13: #{llama_attention_forward.1} parent=11 // pred_check
          %p231 = pneg %p127
        $region14: #{llama_attention_forward.1} parent=11 // pred_check_branch
          %233 = sbr.rel (%p231) target = $region16
        $region15: #{llama_attention_forward.1} parent=11 // pred_region
          _
        $region16: #{llama_attention_forward.1} parent=11 // pred_fallthru
          _
        // Predicated region
        $region17: #{llama_attention_forward.1} parent=11 // pred_check
          %p234 = pneg %p148
        $region18: #{llama_attention_forward.1} parent=11 // pred_check_branch
          %236 = sbr.rel (%p234) target = $region20
        $region19: #{llama_attention_forward.1} parent=11 // pred_region
          _
        $region20: #{llama_attention_forward.1} parent=11 // pred_fallthru
          _
        // Predicated region
        $region21: #{llama_attention_forward.1} parent=11 // pred_check
          %p237 = pneg %p169
        $region22: #{llama_attention_forward.1} parent=11 // pred_check_branch
          %239 = sbr.rel (%p237) target = $region24
        $region23: #{llama_attention_forward.1} parent=11 // pred_region
          _
        $region24: #{llama_attention_forward.1} parent=11 // pred_fallthru
          _
        // Predicated region
        $region25: #{llama_attention_forward.1} parent=11 // pred_check
          %p240 = pneg %p190
        $region26: #{llama_attention_forward.1} parent=11 // pred_check_branch
          %242 = sbr.rel (%p240) target = $region28
        $region27: #{llama_attention_forward.1} parent=11 // pred_region
          _
        $region28: #{llama_attention_forward.1} parent=11 // pred_fallthru
          _
      $region12: #{llama_attention_forward.1} parent=5 // pred_fallthru
        _
      %p243 = scmp.lt.s32.totalorder %s16, 4
      // Predicated region
      $region29: #{llama_attention_forward.1} parent=5 // pred_check
        %p244 = pneg %p243
      $region30: #{llama_attention_forward.1} parent=5 // pred_check_branch
        %246 = sbr.rel (%p244) target = $region32
      $region31: #{llama_attention_forward.1} parent=5 // pred_region
        // Predicated region
        $region33: #{llama_attention_forward.1} parent=31 // pred_check
          %p247 = pneg %p48
        $region34: #{llama_attention_forward.1} parent=31 // pred_check_branch
          %249 = sbr.rel (%p247) target = $region36
        $region35: #{llama_attention_forward.1} parent=31 // pred_region
          %p250 = scmp.lt.s32.totalorder %s23, 1
          %s251 = scalar_select %p250, %s23, 1
          %s252 = smul.addr %s251, 4
          %s253 = smul.addr %s252, 8
          %s254 = scalar_lea.vmem %s0, %s253
        $region36: #{llama_attention_forward.1} parent=31 // pred_fallthru
          _
        // Predicated region
        $region37: #{llama_attention_forward.1} parent=31 // pred_check
          %p255 = pneg %p74
        $region38: #{llama_attention_forward.1} parent=31 // pred_check_branch
          %257 = sbr.rel (%p255) target = $region40
        $region39: #{llama_attention_forward.1} parent=31 // pred_region
          %p258 = scmp.lt.s32.totalorder %s24, 1
          %s259 = scalar_select %p258, %s24, 1
          %s260 = smul.addr %s259, 96
          %s261 = smul.addr %s260, 4
          %s262 = scalar_lea.vmem %s1, %s261
        $region40: #{llama_attention_forward.1} parent=31 // pred_fallthru
          _
        // Predicated region
        $region41: #{llama_attention_forward.1} parent=31 // pred_check
          %p263 = pneg %p100
        $region42: #{llama_attention_forward.1} parent=31 // pred_check_branch
          %265 = sbr.rel (%p263) target = $region44
        $region43: #{llama_attention_forward.1} parent=31 // pred_region
          %p266 = scmp.lt.s32.totalorder %s24, 1
          %s267 = scalar_select %p266, %s24, 1
          %s268 = smul.addr %s267, 32
          %s269 = smul.addr %s268, 4
          %s270 = scalar_lea.vmem %s2, %s269
        $region44: #{llama_attention_forward.1} parent=31 // pred_fallthru
          _
      $region32: #{llama_attention_forward.1} parent=5 // pred_fallthru
        _
      %p271 = scmp.le.s32.totalorder 1, %s16
      %p272 = scmp.lt.s32.totalorder %s16, 5
      %p273 = pnand %p271, %p272
      %p274 = pneg %p273
      // Predicated region
      $region45: #{llama_attention_forward.1} parent=5 // pred_check
        _
      $region46: #{llama_attention_forward.1} parent=5 // pred_check_branch
        %276 = sbr.rel (%p273) target = $region48
      $region47: #{llama_attention_forward.1} parent=5 // pred_region
        %s277 = ssub.s32 %s16, 1
        %p278 = scmp.lt.s32.totalorder %s25, 1
        %s279 = scalar_select %p278, %s25, 1
        %s280 = smul.addr %s279, 4
        %s281 = smul.addr %s280, 8
        %s282 = scalar_lea.vmem %s0, %s281
        %p283 = pneg %p54
        %p284 = pneg %p51
        %p285 = scmp.lt.s32.totalorder %s26, 1
        %s286 = scalar_select %p285, %s26, 1
        %s287 = smul.addr %s286, 96
        %s288 = smul.addr %s287, 4
        %s289 = scalar_lea.vmem %s1, %s288
        %p290 = pneg %p80
        %p291 = pneg %p77
        %p292 = scmp.lt.s32.totalorder %s26, 1
        %s293 = scalar_select %p292, %s26, 1
        %s294 = smul.addr %s293, 32
        %s295 = smul.addr %s294, 4
        %s296 = scalar_lea.vmem %s2, %s295
        %p297 = pneg %p106
        %p298 = pneg %p103
        %p299 = pneg %p127
        %p300 = pneg %p124
        %p301 = pneg %p148
        %p302 = pneg %p145
        %p303 = pneg %p169
        %p304 = pneg %p166
        %p305 = pneg %p190
        %p306 = pneg %p187
        %p307 = pneg %p216
        %p308 = pneg %p213
        %s309 = sand.u32 %s203, 1
        %s310 = scalar_lea.sflag [#allocation4], %s309
        %s311 = sand.u32 %s203, 1
        %s312 = smul.addr %s311, 32
        %s313 = scalar_lea.vmem [#allocation3], %s312
        %p314 = scmp.lt.s32.totalorder %s25, 1
        %s315 = scalar_select %p314, %s25, 1
        %s316 = smul.addr %s315, 4
        %s317 = smul.addr %s316, 8
        %s318 = scalar_lea.vmem %s0, %s317
        %p319 = scmp.lt.s32.totalorder %s26, 1
        %s320 = scalar_select %p319, %s26, 1
        %s321 = smul.addr %s320, 96
        %s322 = smul.addr %s321, 4
        %s323 = scalar_lea.vmem %s1, %s322
        %p324 = scmp.lt.s32.totalorder %s26, 1
        %s325 = scalar_select %p324, %s26, 1
        %s326 = smul.addr %s325, 32
        %s327 = smul.addr %s326, 4
        %s328 = scalar_lea.vmem %s2, %s327
        %p330 = scmp.eq.s32.totalorder %s26, 0
        // Predicated region
        $region49: #{llama_attention_forward.1} parent=47 // pred_check
          %p331 = pneg %p330
        $region50: #{llama_attention_forward.1} parent=47 // pred_check_branch
          %333 = sbr.rel (%p331) target = $region52
        $region51: #{llama_attention_forward.1} parent=47 // pred_region
          %334 = vst [vmem:[#allocation2] sm:$0xff] 0.0
          %335 = vst [vmem:[#allocation2 + $0x8] sm:$0xff] 0.0
          %336 = vst [vmem:[#allocation2 + $0x10] sm:$0xff] 0.0
          %337 = vst [vmem:[#allocation2 + $0x18] sm:$0xff] 0.0
        $region52: #{llama_attention_forward.1} parent=47 // pred_fallthru
          _
        %v338 = vld [vmem:[%s318] sm:$0xff]
        %v339 = vld [vmem:[%s318 + $0x8] sm:$0xff]
        %v340 = vld [vmem:[%s318 + $0x10] sm:$0xff]
        %v341 = vld [vmem:[%s318 + $0x18] sm:$0xff]
        %v342 = vpack.c.bf16 %v340, %v338
        %v343 = vpack.c.bf16 %v341, %v339
        %v344 = vld [vmem:[%s323] sm:$0xff]
        %v345 = vld [vmem:[%s323 + $0x8] sm:$0xf]
        %v346 = vld [vmem:[%s323 + $0xc] sm:$0xff]
        %v347 = vld [vmem:[%s323 + $0x14] sm:$0xf]
        %v348 = vld [vmem:[%s323 + $0x18] sm:$0xff]
        %v349 = vld [vmem:[%s323 + $0x20] sm:$0xf]
        %v350 = vld [vmem:[%s323 + $0x24] sm:$0xff]
        %v351 = vld [vmem:[%s323 + $0x2c] sm:$0xf]
        %v352 = vld [vmem:[%s323 + $0x30] sm:$0xff]
        %v353 = vld [vmem:[%s323 + $0x38] sm:$0xf]
        %v354 = vld [vmem:[%s323 + $0x3c] sm:$0xff]
        %v355 = vld [vmem:[%s323 + $0x44] sm:$0xf]
        %v356 = vld [vmem:[%s323 + $0x48] sm:$0xff]
        %v357 = vld [vmem:[%s323 + $0x50] sm:$0xf]
        %v358 = vld [vmem:[%s323 + $0x54] sm:$0xff]
        %v359 = vld [vmem:[%s323 + $0x5c] sm:$0xf]
        %v360 = vld [vmem:[%s323 + $0x60] sm:$0xff]
        %v361 = vld [vmem:[%s323 + $0x68] sm:$0xf]
        %v362 = vld [vmem:[%s323 + $0x6c] sm:$0xff]
        %v363 = vld [vmem:[%s323 + $0x74] sm:$0xf]
        %v364 = vld [vmem:[%s323 + $0x78] sm:$0xff]
        %v365 = vld [vmem:[%s323 + $0x80] sm:$0xf]
        %v366 = vld [vmem:[%s323 + $0x84] sm:$0xff]
        %v367 = vld [vmem:[%s323 + $0x8c] sm:$0xf]
        %v368 = vld [vmem:[%s323 + $0x90] sm:$0xff]
        %v369 = vld [vmem:[%s323 + $0x98] sm:$0xf]
        %v370 = vld [vmem:[%s323 + $0x9c] sm:$0xff]
        %v371 = vld [vmem:[%s323 + $0xa4] sm:$0xf]
        %v372 = vld [vmem:[%s323 + $0xa8] sm:$0xff]
        %v373 = vld [vmem:[%s323 + $0xb0] sm:$0xf]
        %v374 = vld [vmem:[%s323 + $0xb4] sm:$0xff]
        %v375 = vld [vmem:[%s323 + $0xbc] sm:$0xf]
        %v376 = vld [vmem:[%s323 + $0xc0] sm:$0xff]
        %v377 = vld [vmem:[%s323 + $0xc8] sm:$0xf]
        %v378 = vld [vmem:[%s323 + $0xcc] sm:$0xff]
        %v379 = vld [vmem:[%s323 + $0xd4] sm:$0xf]
        %v380 = vld [vmem:[%s323 + $0xd8] sm:$0xff]
        %v381 = vld [vmem:[%s323 + $0xe0] sm:$0xf]
        %v382 = vld [vmem:[%s323 + $0xe4] sm:$0xff]
        %v383 = vld [vmem:[%s323 + $0xec] sm:$0xf]
        %v384 = vld [vmem:[%s323 + $0xf0] sm:$0xff]
        %v385 = vld [vmem:[%s323 + $0xf8] sm:$0xf]
        %v386 = vld [vmem:[%s323 + $0xfc] sm:$0xff]
        %v387 = vld [vmem:[%s323 + $0x104] sm:$0xf]
        %v388 = vld [vmem:[%s323 + $0x108] sm:$0xff]
        %v389 = vld [vmem:[%s323 + $0x110] sm:$0xf]
        %v390 = vld [vmem:[%s323 + $0x114] sm:$0xff]
        %v391 = vld [vmem:[%s323 + $0x11c] sm:$0xf]
        %v392 = vld [vmem:[%s323 + $0x120] sm:$0xff]
        %v393 = vld [vmem:[%s323 + $0x128] sm:$0xf]
        %v394 = vld [vmem:[%s323 + $0x12c] sm:$0xff]
        %v395 = vld [vmem:[%s323 + $0x134] sm:$0xf]
        %v396 = vld [vmem:[%s323 + $0x138] sm:$0xff]
        %v397 = vld [vmem:[%s323 + $0x140] sm:$0xf]
        %v398 = vld [vmem:[%s323 + $0x144] sm:$0xff]
        %v399 = vld [vmem:[%s323 + $0x14c] sm:$0xf]
        %v400 = vld [vmem:[%s323 + $0x150] sm:$0xff]
        %v401 = vld [vmem:[%s323 + $0x158] sm:$0xf]
        %v402 = vld [vmem:[%s323 + $0x15c] sm:$0xff]
        %v403 = vld [vmem:[%s323 + $0x164] sm:$0xf]
        %v404 = vld [vmem:[%s323 + $0x168] sm:$0xff]
        %v405 = vld [vmem:[%s323 + $0x170] sm:$0xf]
        %v406 = vld [vmem:[%s323 + $0x174] sm:$0xff]
        %v407 = vld [vmem:[%s323 + $0x17c] sm:$0xf]
        %v472 = vunpack.c.l.b16 %v344
        %v473 = vunpack.c.h.b16 %v344
        %v474 = vunpack.c.l.b16 %v345
        %v475 = vunpack.c.l.b16 %v346
        %v476 = vunpack.c.h.b16 %v346
        %v477 = vunpack.c.l.b16 %v347
        %v478 = vunpack.c.l.b16 %v348
        %v479 = vunpack.c.h.b16 %v348
        %v480 = vunpack.c.l.b16 %v349
        %v481 = vunpack.c.l.b16 %v350
        %v482 = vunpack.c.h.b16 %v350
        %v483 = vunpack.c.l.b16 %v351
        %v484 = vunpack.c.l.b16 %v352
        %v485 = vunpack.c.h.b16 %v352
        %v486 = vunpack.c.l.b16 %v353
        %v487 = vunpack.c.l.b16 %v354
        %v488 = vunpack.c.h.b16 %v354
        %v489 = vunpack.c.l.b16 %v355
        %v490 = vunpack.c.l.b16 %v356
        %v491 = vunpack.c.h.b16 %v356
        %v492 = vunpack.c.l.b16 %v357
        %v493 = vunpack.c.l.b16 %v358
        %v494 = vunpack.c.h.b16 %v358
        %v495 = vunpack.c.l.b16 %v359
        %v496 = vunpack.c.l.b16 %v360
        %v497 = vunpack.c.h.b16 %v360
        %v498 = vunpack.c.l.b16 %v361
        %v499 = vunpack.c.l.b16 %v362
        %v500 = vunpack.c.h.b16 %v362
        %v501 = vunpack.c.l.b16 %v363
        %v502 = vunpack.c.l.b16 %v364
        %v503 = vunpack.c.h.b16 %v364
        %v504 = vunpack.c.l.b16 %v365
        %v505 = vunpack.c.l.b16 %v366
        %v506 = vunpack.c.h.b16 %v366
        %v507 = vunpack.c.l.b16 %v367
        %v508 = vunpack.c.l.b16 %v368
        %v509 = vunpack.c.h.b16 %v368
        %v510 = vunpack.c.l.b16 %v369
        %v511 = vunpack.c.l.b16 %v370
        %v512 = vunpack.c.h.b16 %v370
        %v513 = vunpack.c.l.b16 %v371
        %v514 = vunpack.c.l.b16 %v372
        %v515 = vunpack.c.h.b16 %v372
        %v516 = vunpack.c.l.b16 %v373
        %v517 = vunpack.c.l.b16 %v374
        %v518 = vunpack.c.h.b16 %v374
        %v519 = vunpack.c.l.b16 %v375
        %v520 = vunpack.c.l.b16 %v376
        %v521 = vunpack.c.h.b16 %v376
        %v522 = vunpack.c.l.b16 %v377
        %v523 = vunpack.c.l.b16 %v378
        %v524 = vunpack.c.h.b16 %v378
        %v525 = vunpack.c.l.b16 %v379
        %v526 = vunpack.c.l.b16 %v380
        %v527 = vunpack.c.h.b16 %v380
        %v528 = vunpack.c.l.b16 %v381
        %v529 = vunpack.c.l.b16 %v382
        %v530 = vunpack.c.h.b16 %v382
        %v531 = vunpack.c.l.b16 %v383
        %v532 = vunpack.c.l.b16 %v384
        %v533 = vunpack.c.h.b16 %v384
        %v534 = vunpack.c.l.b16 %v385
        %v535 = vunpack.c.l.b16 %v386
        %v536 = vunpack.c.h.b16 %v386
        %v537 = vunpack.c.l.b16 %v387
        %v538 = vunpack.c.l.b16 %v388
        %v539 = vunpack.c.h.b16 %v388
        %v540 = vunpack.c.l.b16 %v389
        %v541 = vunpack.c.l.b16 %v390
        %v542 = vunpack.c.h.b16 %v390
        %v543 = vunpack.c.l.b16 %v391
        %v544 = vunpack.c.l.b16 %v392
        %v545 = vunpack.c.h.b16 %v392
        %v546 = vunpack.c.l.b16 %v393
        %v547 = vunpack.c.l.b16 %v394
        %v548 = vunpack.c.h.b16 %v394
        %v549 = vunpack.c.l.b16 %v395
        %v550 = vunpack.c.l.b16 %v396
        %v551 = vunpack.c.h.b16 %v396
        %v552 = vunpack.c.l.b16 %v397
        %v553 = vunpack.c.l.b16 %v398
        %v554 = vunpack.c.h.b16 %v398
        %v555 = vunpack.c.l.b16 %v399
        %v556 = vunpack.c.l.b16 %v400
        %v557 = vunpack.c.h.b16 %v400
        %v558 = vunpack.c.l.b16 %v401
        %v559 = vunpack.c.l.b16 %v402
        %v560 = vunpack.c.h.b16 %v402
        %v561 = vunpack.c.l.b16 %v403
        %v562 = vunpack.c.l.b16 %v404
        %v563 = vunpack.c.h.b16 %v404
        %v564 = vunpack.c.l.b16 %v405
        %v565 = vunpack.c.l.b16 %v406
        %v566 = vunpack.c.h.b16 %v406
        %v567 = vunpack.c.l.b16 %v407
        %v568 = vpack.c.b16 %v475, %v472
        %v569 = vpack.c.b16 %v476, %v473
        %v570 = vpack.c.b16 %v477, %v474
        %v571 = vpack.c.b16 %v481, %v478
        %v572 = vpack.c.b16 %v482, %v479
        %v573 = vpack.c.b16 %v483, %v480
        %v574 = vpack.c.b16 %v487, %v484
        %v575 = vpack.c.b16 %v488, %v485
        %v576 = vpack.c.b16 %v489, %v486
        %v577 = vpack.c.b16 %v493, %v490
        %v578 = vpack.c.b16 %v494, %v491
        %v579 = vpack.c.b16 %v495, %v492
        %v580 = vpack.c.b16 %v499, %v496
        %v581 = vpack.c.b16 %v500, %v497
        %v582 = vpack.c.b16 %v501, %v498
        %v583 = vpack.c.b16 %v505, %v502
        %v584 = vpack.c.b16 %v506, %v503
        %v585 = vpack.c.b16 %v507, %v504
        %v586 = vpack.c.b16 %v511, %v508
        %v587 = vpack.c.b16 %v512, %v509
        %v588 = vpack.c.b16 %v513, %v510
        %v589 = vpack.c.b16 %v517, %v514
        %v590 = vpack.c.b16 %v518, %v515
        %v591 = vpack.c.b16 %v519, %v516
        %v592 = vpack.c.b16 %v523, %v520
        %v593 = vpack.c.b16 %v524, %v521
        %v594 = vpack.c.b16 %v525, %v522
        %v595 = vpack.c.b16 %v529, %v526
        %v596 = vpack.c.b16 %v530, %v527
        %v597 = vpack.c.b16 %v531, %v528
        %v598 = vpack.c.b16 %v535, %v532
        %v599 = vpack.c.b16 %v536, %v533
        %v600 = vpack.c.b16 %v537, %v534
        %v601 = vpack.c.b16 %v541, %v538
        %v602 = vpack.c.b16 %v542, %v539
        %v603 = vpack.c.b16 %v543, %v540
        %v604 = vpack.c.b16 %v547, %v544
        %v605 = vpack.c.b16 %v548, %v545
        %v606 = vpack.c.b16 %v549, %v546
        %v607 = vpack.c.b16 %v553, %v550
        %v608 = vpack.c.b16 %v554, %v551
        %v609 = vpack.c.b16 %v555, %v552
        %v610 = vpack.c.b16 %v559, %v556
        %v611 = vpack.c.b16 %v560, %v557
        %v612 = vpack.c.b16 %v561, %v558
        %v613 = vpack.c.b16 %v565, %v562
        %v614 = vpack.c.b16 %v566, %v563
        %v615 = vpack.c.b16 %v567, %v564
        %664 = vmatpush.bf16.msra.mxu0 %v589
        %665 = vmatpush.bf16.msra.mxu0 %v586
        %666 = vmatpush.bf16.msra.mxu0 %v583
        %667 = vmatpush.bf16.msra.mxu0 %v580
        %668 = vmatpush.bf16.msra.mxu0 %v577
        %669 = vmatpush.bf16.msra.mxu0 %v574
        %670 = vmatpush.bf16.msra.mxu0 %v571
        %671 = vmatpush.bf16.msra.mxu0 %v568
        %672 = vmatmul.bf16.gmra.mxu0 %v342
        %v673 = vpop.f32.mrf.mxu0
        %v674 = vadd.f32 0.0, %v673
        %v675 = vpop.f32.mrf.mxu0
        %v676 = vadd.f32 0.0, %v675
        %677 = vdwg.mxu0
        %678 = vmatpush.bf16.msra.mxu0 %v613
        %679 = vmatpush.bf16.msra.mxu0 %v610
        %680 = vmatpush.bf16.msra.mxu0 %v607
        %681 = vmatpush.bf16.msra.mxu0 %v604
        %682 = vmatpush.bf16.msra.mxu0 %v601
        %683 = vmatpush.bf16.msra.mxu0 %v598
        %684 = vmatpush.bf16.msra.mxu0 %v595
        %685 = vmatpush.bf16.msra.mxu0 %v592
        %686 = vmatmul.bf16.gmra.mxu0 %v343
        %v687 = vpop.f32.mrf.mxu0
        %v688 = vadd.f32 %v674, %v687
        %v689 = vpop.f32.mrf.mxu0
        %v690 = vadd.f32 %v676, %v689
        %691 = vdwg.mxu0
        %692 = vmatpush.bf16.msra.mxu0 %v590
        %693 = vmatpush.bf16.msra.mxu0 %v587
        %694 = vmatpush.bf16.msra.mxu0 %v584
        %695 = vmatpush.bf16.msra.mxu0 %v581
        %696 = vmatpush.bf16.msra.mxu0 %v578
        %697 = vmatpush.bf16.msra.mxu0 %v575
        %698 = vmatpush.bf16.msra.mxu0 %v572
        %699 = vmatpush.bf16.msra.mxu0 %v569
        %700 = vmatmul.bf16.gmra.mxu0 %v342
        %v701 = vpop.f32.mrf.mxu0
        %v702 = vadd.f32 0.0, %v701
        %v703 = vpop.f32.mrf.mxu0
        %v704 = vadd.f32 0.0, %v703
        %705 = vdwg.mxu0
        %706 = vmatpush.bf16.msra.mxu0 %v614
        %707 = vmatpush.bf16.msra.mxu0 %v611
        %708 = vmatpush.bf16.msra.mxu0 %v608
        %709 = vmatpush.bf16.msra.mxu0 %v605
        %710 = vmatpush.bf16.msra.mxu0 %v602
        %711 = vmatpush.bf16.msra.mxu0 %v599
        %712 = vmatpush.bf16.msra.mxu0 %v596
        %713 = vmatpush.bf16.msra.mxu0 %v593
        %714 = vmatmul.bf16.gmra.mxu0 %v343
        %v715 = vpop.f32.mrf.mxu0
        %v716 = vadd.f32 %v702, %v715
        %v717 = vpop.f32.mrf.mxu0
        %v718 = vadd.f32 %v704, %v717
        %719 = vdwg.mxu0
        %720 = vmatpush.bf16.msra.mxu0 %v591
        %721 = vmatpush.bf16.msra.mxu0 %v588
        %722 = vmatpush.bf16.msra.mxu0 %v585
        %723 = vmatpush.bf16.msra.mxu0 %v582
        %724 = vmatpush.bf16.msra.mxu0 %v579
        %725 = vmatpush.bf16.msra.mxu0 %v576
        %726 = vmatpush.bf16.msra.mxu0 %v573
        %727 = vmatpush.bf16.msra.mxu0 %v570
        %728 = vmatmul.bf16.gmra.mxu0 %v342
        %v729 = vpop.f32.mrf.mxu0
        %v730 = vadd.f32 0.0, %v729
        %v731 = vpop.f32.mrf.mxu0
        %v732 = vadd.f32 0.0, %v731
        %733 = vdwg.mxu0
        %734 = vmatpush.bf16.msra.mxu0 %v615
        %735 = vmatpush.bf16.msra.mxu0 %v612
        %736 = vmatpush.bf16.msra.mxu0 %v609
        %737 = vmatpush.bf16.msra.mxu0 %v606
        %738 = vmatpush.bf16.msra.mxu0 %v603
        %739 = vmatpush.bf16.msra.mxu0 %v600
        %740 = vmatpush.bf16.msra.mxu0 %v597
        %741 = vmatpush.bf16.msra.mxu0 %v594
        %742 = vmatmul.bf16.gmra.mxu0 %v343
        %v743 = vpop.f32.mrf.mxu0
        %v744 = vadd.f32 %v730, %v743
        %v745 = vpop.f32.mrf.mxu0
        %v746 = vadd.f32 %v732, %v745
        %747 = vdwg.mxu0
        %v748 = vld [vmem:[%s3] sm:$0xff]
        %v749 = vld [vmem:[%s3 + $0x8] sm:$0xff]
        %v750 = vmul.f32 %v688, %v748
        %v751 = vmul.f32 %v690, %v749
        %752 = vrot.lane.b32.xlu0 %v688, 64
        %v753 = vpop.permute.xlu0 %752
        %754 = vrot.lane.b32.xlu0 %v690, 64
        %v755 = vpop.permute.xlu0 %754
        %v756 = vld [vmem:[%s4] sm:$0xff]
        %v757 = vld [vmem:[%s4 + $0x8] sm:$0xff]
        %v758 = vmul.f32 %v753, %v756
        %v759 = vmul.f32 %v755, %v757
        %v760 = vadd.f32 %v750, %v758
        %v761 = vadd.f32 %v751, %v759
        %v762 = vld [vmem:[%s5] sm:$0xff]
        %v763 = vld [vmem:[%s5 + $0x8] sm:$0xff]
        %v764 = vmul.f32 %v716, %v762
        %v765 = vmul.f32 %v718, %v763
        %766 = vrot.lane.b32.xlu0 %v716, 64
        %v767 = vpop.permute.xlu0 %766
        %768 = vrot.lane.b32.xlu0 %v718, 64
        %v769 = vpop.permute.xlu0 %768
        %v770 = vld [vmem:[%s6] sm:$0xff]
        %v771 = vld [vmem:[%s6 + $0x8] sm:$0xff]
        %v772 = vmul.f32 %v767, %v770
        %v773 = vmul.f32 %v769, %v771
        %v774 = vadd.f32 %v764, %v772
        %v775 = vadd.f32 %v765, %v773
        %v776 = vpack.c.bf16 %v761, %v760
        %v777 = vpack.c.bf16 %v775, %v774
        %778 = vmatpush.bf16.xpose.msra.mxu0 0
        %779 = vmatpush.bf16.xpose.msra.mxu0 0
        %780 = vmatpush.bf16.xpose.msra.mxu0 0
        %781 = vmatpush.bf16.xpose.msra.mxu0 0
        %782 = vmatpush.bf16.xpose.msra.mxu0 0
        %783 = vmatpush.bf16.xpose.msra.mxu0 0
        %784 = vmatpush.bf16.xpose.msra.mxu0 0
        %785 = vmatpush.bf16.xpose.msra.mxu0 %v777
        %786 = vmatmul.bf16.gmra.mxu0 %v776
        %v787 = vpop.f32.mrf.mxu0
        %v788 = vadd.f32 0.0, %v787
        %v789 = vpop.f32.mrf.mxu0
        %v790 = vadd.f32 0.0, %v789
        %791 = vdwg.mxu0
        %v792 = vlaneseq
        %v793 = vshrl.u32 %v792, 7
        %v794 = vadd.s32 %v793, 8
        %v795 = vlaneseq
        %v796 = vand.u32 %v795, 127
        %vm797 = vcmp.gt.s32.totalorder %v796, %v793
        %vm798 = vcmp.gt.s32.totalorder %v796, %v794
        %v799 = vsel %vm797, -1e+30, %v788
        %v800 = vsel %vm798, -1e+30, %v790
        %vm801 = vcmask 130048
        %v802 = vsel %vm801, %v799, -inf
        %803 = vmax.xlane.f32.xlu0 %v802
        %v804 = vpop.xlane.xlu0 %803
        %v805 = vsel %vm801, %v800, -inf
        %806 = vmax.xlane.f32.xlu0 %v805
        %v807 = vpop.xlane.xlu0 %806
        %v808 = vsub.f32 %v799, %v804
        %v809 = vsub.f32 %v800, %v807
        %v810 = vmul.f32 %v808, 1.442695
        %v811 = vpow.pop %v810
        %v812 = vmul.f32 %v809, 1.442695
        %v813 = vpow.pop %v812
        %v814 = vsel %vm801, %v811, 0.0
        %815 = vadd.xlane.f32.xlu0 %v814
        %v816 = vpop.xlane.xlu0 %815
        %v817 = vsel %vm801, %v813, 0.0
        %818 = vadd.xlane.f32.xlu0 %v817
        %v819 = vpop.xlane.xlu0 %818
        %v820 = vrcp.pop %v816
        %v821 = vrcp.pop %v819
        %v822 = vmul.f32 %v811, %v820
        %v823 = vmul.f32 %v813, %v821
        %v824 = vpack.c.bf16 %v823, %v822
        %v825 = vpack.c.bf16 %v746, %v744
        %v827 = vsel %vm801, %v824, 0
        %829 = vmatpush.bf16.msra.mxu0 0
        %830 = vmatpush.bf16.msra.mxu0 0
        %831 = vmatpush.bf16.msra.mxu0 0
        %832 = vmatpush.bf16.msra.mxu0 0
        %833 = vmatpush.bf16.msra.mxu0 0
        %834 = vmatpush.bf16.msra.mxu0 0
        %835 = vmatpush.bf16.msra.mxu0 0
        %836 = vmatpush.bf16.msra.mxu0 %v825
        %837 = vmatmul.bf16.gmra.mxu0 %v827
        %v838 = vpop.f32.mrf.mxu0
        %v839 = vadd.f32 0.0, %v838
        %v840 = vpop.f32.mrf.mxu0
        %v841 = vadd.f32 0.0, %v840
        %842 = vdwg.mxu0
        %v843 = vld [vmem:[#allocation2] sm:$0xff]
        %v844 = vld [vmem:[#allocation2 + $0x8] sm:$0xff]
        %v845 = vld [vmem:[#allocation2 + $0x10] sm:$0xff]
        %v846 = vld [vmem:[#allocation2 + $0x18] sm:$0xff]
        %v847 = vpack.c.bf16 %v841, %v839
        %v848 = vld [vmem:[%s328] sm:$0xff]
        %v849 = vld [vmem:[%s328 + $0x8] sm:$0xff]
        %v850 = vld [vmem:[%s328 + $0x10] sm:$0xff]
        %v851 = vld [vmem:[%s328 + $0x18] sm:$0xff]
        %v852 = vld [vmem:[%s328 + $0x20] sm:$0xff]
        %v853 = vld [vmem:[%s328 + $0x28] sm:$0xff]
        %v854 = vld [vmem:[%s328 + $0x30] sm:$0xff]
        %v855 = vld [vmem:[%s328 + $0x38] sm:$0xff]
        %v856 = vld [vmem:[%s328 + $0x40] sm:$0xff]
        %v857 = vld [vmem:[%s328 + $0x48] sm:$0xff]
        %v858 = vld [vmem:[%s328 + $0x50] sm:$0xff]
        %v859 = vld [vmem:[%s328 + $0x58] sm:$0xff]
        %v860 = vld [vmem:[%s328 + $0x60] sm:$0xff]
        %v861 = vld [vmem:[%s328 + $0x68] sm:$0xff]
        %v862 = vld [vmem:[%s328 + $0x70] sm:$0xff]
        %v863 = vld [vmem:[%s328 + $0x78] sm:$0xff]
        %v880 = vunpack.c.l.b16 %v848
        %v881 = vunpack.c.h.b16 %v848
        %v882 = vunpack.c.l.b16 %v849
        %v883 = vunpack.c.h.b16 %v849
        %v884 = vunpack.c.l.b16 %v850
        %v885 = vunpack.c.h.b16 %v850
        %v886 = vunpack.c.l.b16 %v851
        %v887 = vunpack.c.h.b16 %v851
        %v888 = vunpack.c.l.b16 %v852
        %v889 = vunpack.c.h.b16 %v852
        %v890 = vunpack.c.l.b16 %v853
        %v891 = vunpack.c.h.b16 %v853
        %v892 = vunpack.c.l.b16 %v854
        %v893 = vunpack.c.h.b16 %v854
        %v894 = vunpack.c.l.b16 %v855
        %v895 = vunpack.c.h.b16 %v855
        %v896 = vunpack.c.l.b16 %v856
        %v897 = vunpack.c.h.b16 %v856
        %v898 = vunpack.c.l.b16 %v857
        %v899 = vunpack.c.h.b16 %v857
        %v900 = vunpack.c.l.b16 %v858
        %v901 = vunpack.c.h.b16 %v858
        %v902 = vunpack.c.l.b16 %v859
        %v903 = vunpack.c.h.b16 %v859
        %v904 = vunpack.c.l.b16 %v860
        %v905 = vunpack.c.h.b16 %v860
        %v906 = vunpack.c.l.b16 %v861
        %v907 = vunpack.c.h.b16 %v861
        %v908 = vunpack.c.l.b16 %v862
        %v909 = vunpack.c.h.b16 %v862
        %v910 = vunpack.c.l.b16 %v863
        %v911 = vunpack.c.h.b16 %v863
        %v912 = vpack.c.b16 %v882, %v880
        %v913 = vpack.c.b16 %v883, %v881
        %v914 = vpack.c.b16 %v886, %v884
        %v915 = vpack.c.b16 %v887, %v885
        %v916 = vpack.c.b16 %v890, %v888
        %v917 = vpack.c.b16 %v891, %v889
        %v918 = vpack.c.b16 %v894, %v892
        %v919 = vpack.c.b16 %v895, %v893
        %v920 = vpack.c.b16 %v898, %v896
        %v921 = vpack.c.b16 %v899, %v897
        %v922 = vpack.c.b16 %v902, %v900
        %v923 = vpack.c.b16 %v903, %v901
        %v924 = vpack.c.b16 %v906, %v904
        %v925 = vpack.c.b16 %v907, %v905
        %v926 = vpack.c.b16 %v910, %v908
        %v927 = vpack.c.b16 %v911, %v909
        %944 = vmatpush.bf16.msra.mxu0 %v926
        %945 = vmatpush.bf16.msra.mxu0 %v924
        %946 = vmatpush.bf16.msra.mxu0 %v922
        %947 = vmatpush.bf16.msra.mxu0 %v920
        %948 = vmatpush.bf16.msra.mxu0 %v918
        %949 = vmatpush.bf16.msra.mxu0 %v916
        %950 = vmatpush.bf16.msra.mxu0 %v914
        %951 = vmatpush.bf16.msra.mxu0 %v912
        %952 = vmatmul.bf16.gmra.mxu0 %v847
        %v953 = vpop.f32.mrf.mxu0
        %v954 = vadd.f32 0.0, %v953
        %v955 = vpop.f32.mrf.mxu0
        %v956 = vadd.f32 0.0, %v955
        %957 = vdwg.mxu0
        %958 = vmatpush.bf16.msra.mxu0 %v927
        %959 = vmatpush.bf16.msra.mxu0 %v925
        %960 = vmatpush.bf16.msra.mxu0 %v923
        %961 = vmatpush.bf16.msra.mxu0 %v921
        %962 = vmatpush.bf16.msra.mxu0 %v919
        %963 = vmatpush.bf16.msra.mxu0 %v917
        %964 = vmatpush.bf16.msra.mxu0 %v915
        %965 = vmatpush.bf16.msra.mxu0 %v913
        %966 = vmatmul.bf16.gmra.mxu0 %v847
        %v967 = vpop.f32.mrf.mxu0
        %v968 = vadd.f32 0.0, %v967
        %v969 = vpop.f32.mrf.mxu0
        %v970 = vadd.f32 0.0, %v969
        %971 = vdwg.mxu0
        %v972 = vadd.f32 %v843, %v954
        %v973 = vadd.f32 %v844, %v968
        %v974 = vadd.f32 %v845, %v956
        %v975 = vadd.f32 %v846, %v970
        %976 = vst [vmem:[#allocation2] sm:$0xff] %v972
        %977 = vst [vmem:[#allocation2 + $0x8] sm:$0xff] %v973
        %978 = vst [vmem:[#allocation2 + $0x10] sm:$0xff] %v974
        %979 = vst [vmem:[#allocation2 + $0x18] sm:$0xff] %v975
        %p980 = scmp.eq.s32.totalorder %s26, 1
        // Predicated region
        $region53: #{llama_attention_forward.1} parent=47 // pred_check
          %p981 = pneg %p980
        $region54: #{llama_attention_forward.1} parent=47 // pred_check_branch
          %983 = sbr.rel (%p981) target = $region56
        $region55: #{llama_attention_forward.1} parent=47 // pred_region
          %v984 = vld [vmem:[#allocation2] sm:$0xff]
          %v985 = vld [vmem:[#allocation2 + $0x8] sm:$0xff]
          %v986 = vld [vmem:[#allocation2 + $0x10] sm:$0xff]
          %v987 = vld [vmem:[#allocation2 + $0x18] sm:$0xff]
          %988 = vst [vmem:[%s313] sm:$0xff] %v984
          %989 = vst [vmem:[%s313 + $0x8] sm:$0xff] %v985
          %990 = vst [vmem:[%s313 + $0x10] sm:$0xff] %v986
          %991 = vst [vmem:[%s313 + $0x18] sm:$0xff] %v987
        $region56: #{llama_attention_forward.1} parent=47 // pred_fallthru
          _
        %s992 = sand.u32 %s203, 1
        %s993 = scalar_lea.sflag [#allocation4], %s992
        %s994 = sand.u32 %s203, 1
        %s995 = smul.addr %s994, 32
        %s996 = scalar_lea.vmem [#allocation3], %s995
        // Predicated region
        $region57: #{llama_attention_forward.1} parent=47 // pred_check
          %p997 = pneg %p213
        $region58: #{llama_attention_forward.1} parent=47 // pred_check_branch
          %999 = sbr.rel (%p997) target = $region60
        $region59: #{llama_attention_forward.1} parent=47 // pred_region
          %1001 = vsyncadd %s993, 0
          %s1002 = smul.addr %s25, 4
          %s1003 = smul.addr %s1002, 8
          %s1004 = scalar_lea.hbm %s7, %s1003
          %s1005 = sshll.u32 %s996, 4
          %s1006 = int_to_ptr.vmem [resolvable:$true] %s1005
          %s1007 = sshll.u32 %s1004, 4
          %s1008 = int_to_ptr.hbm [resolvable:$true] %s1007
          %1013 = dma.vmem_to_hbm [thread:$0]  %s1006, 512, %s1008, %s993, 256, 256, 16
        $region60: #{llama_attention_forward.1} parent=47 // pred_fallthru
          _
      $region48: #{llama_attention_forward.1} parent=5 // pred_fallthru
        _
      %p1014 = scmp.le.s32.totalorder 2, %s16
      // Predicated region
      $region61: #{llama_attention_forward.1} parent=5 // pred_check
        %p1015 = pneg %p1014
      $region62: #{llama_attention_forward.1} parent=5 // pred_check_branch
        %1017 = sbr.rel (%p1015) target = $region64
      $region63: #{llama_attention_forward.1} parent=5 // pred_region
        %s1018 = ssub.s32 %s16, 2
        // Predicated region
        $region65: #{llama_attention_forward.1} parent=63 // pred_check
          %p1019 = pneg %p219
        $region66: #{llama_attention_forward.1} parent=63 // pred_check_branch
          %1021 = sbr.rel (%p1019) target = $region68
        $region67: #{llama_attention_forward.1} parent=63 // pred_region
          %s1022 = sand.u32 %s204, 1
          %s1023 = scalar_lea.sflag [#allocation4], %s1022
          %s1024 = sand.u32 %s204, 1
          %s1025 = smul.addr %s1024, 32
          %s1026 = scalar_lea.vmem [#allocation3], %s1025
          %1028 = dma.done %s1023, 512
        $region68: #{llama_attention_forward.1} parent=63 // pred_fallthru
          _
      $region64: #{llama_attention_forward.1} parent=5 // pred_fallthru
        _
    $region6: #{llama_attention_forward.1} parent=1 // loop_footer
      %s20 = sadd.s32 1, %s16
    $region7: #{llama_attention_forward.1} parent=1 // loop_footer_branch
      %15 = sbr.rel target = $region3
    $region8: #{llama_attention_forward.1} parent=1 // loop_exit
      _
    %1029 = vsyncpa [#allocation4], 1
    %s1030 = scalar_lea.sflag [#allocation4], 1
    %1031 = vsyncpa %s1030, 1

</llo_original>
